<compile_context>
chip_gen: v7x
topology: tpu7x:2x2x1
jax: 0.10.0
libtpu: 0.0.40
codegen_flags: <defaults>
</compile_context>

<pallas_src>
import math

import jax
import jax.numpy as jnp
from jax.experimental import pallas as pl
from jax.experimental.pallas import tpu as pltpu

EPS = 1e-9
_NUM_CORE_SLICES = 2  # leading parallel axis (2 TCs on v7x; harmless on v5e/v6e)


def _round_up(x, m):
    return ((x + m - 1) // m) * m


def _vmem_budget_bytes():
    phys = 64 * 1024 * 1024
    try:
        info = pltpu.get_tpu_info()
        val = getattr(info, "vmem_capacity_bytes", None)
        if val:
            phys = int(val)
    except Exception:
        pass
    if phys <= 0:
        phys = 64 * 1024 * 1024
    if phys >= 128 * 1024 * 1024:
        return 64 * 1024 * 1024          # v5e / v6e: 128 MiB physical
    return int(phys * 0.7)               # v7x: 64 MiB physical -> ~44 MiB scoped


def _make_kernel(n_valid, rt, lw, nblocks, inv_b):
    def kernel(yhat_ref, y_ref, w_ref, o_ref, acc_ref):
        p = pl.program_id(0)
        i = pl.program_id(1)
        steps = pl.num_programs(1)

        @pl.when(i == 0)
        def _():
            acc_ref[...] = jnp.zeros_like(acc_ref)

        # Upcast after the DMA so HBM traffic stays at the input dtype width.
        diff = yhat_ref[...].astype(jnp.float32) - y_ref[...].astype(jnp.float32)
        vals = jnp.sqrt(diff * diff + EPS)            # EUP sqrt (free slot)

        blk = p * steps + i                           # nominal global row-block
        is_real = blk < nblocks                       # phantom steps contribute 0
        row_base = blk * rt
        clean = (row_base + rt) * lw <= n_valid       # block fully inside valid data

        @pl.when(jnp.logical_and(is_real, clean))
        def _():
            # Steady state: no masking; fold rows into the small (8, LW) accumulator
            # with pure VPU vreg adds (reshape is (8,128)-tile aligned, no relayout).
            acc_ref[...] += vals.reshape(rt // 8, 8, lw).sum(axis=0)

        @pl.when(jnp.logical_and(is_real, jnp.logical_not(clean)))
        def _():
            # Only the final (partial/padded) block pays for the iota tail mask.
            row = jax.lax.broadcasted_iota(jnp.int32, (rt, lw), 0)
            lane = jax.lax.broadcasted_iota(jnp.int32, (rt, lw), 1)
            flat = (row_base + row) * lw + lane
            masked = jnp.where(flat < n_valid, vals, 0.0)
            acc_ref[...] += masked.reshape(rt // 8, 8, lw).sum(axis=0)

        @pl.when(i == steps - 1)
        def _():
            weighted = acc_ref[...] * w_ref[...]                 # (8, LW) * (1, LW)
            col = jnp.sum(weighted, axis=0, keepdims=True)       # (1, LW)
            tot = jnp.sum(col, axis=1, keepdims=True) * inv_b    # (1, 1)
            o_ref[...] = jnp.broadcast_to(tot, o_ref.shape)      # lane-dense store

    return kernel


def mcrmse_loss(yhat, y, weights):
    """yhat, y: [B, C] (any float dtype); weights: [C] -> scalar float32."""
    assert yhat.shape == y.shape and yhat.ndim == 2
    b, c = yhat.shape
    n = b * c
    itemsize = jnp.dtype(yhat.dtype).itemsize

    # Lane width: multiple of 128 (lane-dense) and of C (column == lane % C).
    lw = (128 * c) // math.gcd(128, c)
    rows = -(-n // lw)                                           # cdiv

    vmem_limit = _vmem_budget_bytes()
    # 2 inputs x 2 pipeline buffers x tile stays at <= half the scoped budget.
    tile_bytes = vmem_limit // 8
    sub_q = max(8, 32 // itemsize)                               # sublane quantum
    rt_cap = max(sub_q, (tile_bytes // (lw * itemsize)) // sub_q * sub_q)
    rt = min(rt_cap, _round_up(rows, sub_q))

    # Keep at least one fully in-bounds block; only the tail block is partial and
    # it is masked in-kernel.  Padding triggers only when n % lw != 0 or for tiny
    # inputs — never up to a multiple of the tile size.
    rows_slab = max(rows, rt)
    n_slab = rows_slab * lw

    def _as_slab(x):
        fx = x.reshape(-1)
        if n_slab != n:
            fx = jnp.pad(fx, (0, n_slab - n))
        return fx.reshape(rows_slab, lw)

    yhat2 = _as_slab(yhat)
    y2 = _as_slab(y)
    w_lane = jnp.tile(weights.astype(jnp.float32).reshape(c), lw // c).reshape(1, lw)

    nblocks = -(-rows_slab // rt)
    steps = -(-nblocks // _NUM_CORE_SLICES)

    def data_map(p, i):
        # Clamp so a phantom step (odd block count) never issues an OOB DMA;
        # its contribution is skipped in-kernel via the is_real predicate.
        return (jnp.minimum(p * steps + i, nblocks - 1), 0)

    cost = pl.CostEstimate(
        flops=5 * n,
        transcendentals=n,
        bytes_accessed=2 * n * itemsize + lw * 4 + _NUM_CORE_SLICES * 8 * 128 * 4,
    )

    out = pl.pallas_call(
        _make_kernel(n, rt, lw, nblocks, 1.0 / b),
        out_shape=jax.ShapeDtypeStruct((_NUM_CORE_SLICES * 8, 128), jnp.float32),
        grid_spec=pltpu.PrefetchScalarGridSpec(
            num_scalar_prefetch=0,
            grid=(_NUM_CORE_SLICES, steps),
            in_specs=[
                pl.BlockSpec((rt, lw), data_map),
                pl.BlockSpec((rt, lw), data_map),
                pl.BlockSpec((1, lw), lambda p, i: (0, 0)),
            ],
            out_specs=pl.BlockSpec((8, 128), lambda p, i: (p, 0)),
            scratch_shapes=[pltpu.VMEM((8, lw), jnp.float32)],
        ),
        compiler_params=pltpu.CompilerParams(
            dimension_semantics=("parallel", "arbitrary"),
            vmem_limit_bytes=vmem_limit,
        ),
        cost_estimate=cost,
    )(yhat2, y2, w_lane)

    # Each core slice broadcast its partial over its own (8, 128) output block.
    partials = out.reshape(_NUM_CORE_SLICES, 8, 128)[:, 0, 0]
    return jnp.sum(partials)


def mcrmse_ref(yhat, y, weights):
    """Pure-JAX reference mirroring the PyTorch MCRMSELoss module."""
    score = jnp.float32(0.0)
    for i in range(yhat.shape[1]):
        diff = yhat[:, i].astype(jnp.float32) - y[:, i].astype(jnp.float32)
        score = score + jnp.mean(jnp.sqrt(diff * diff + EPS)) * weights[i]
    return score


if __name__ == "__main__":
    key = jax.random.PRNGKey(0)

    # Case 1: module defaults (num_scored=2), small batch (masked tail path).
    b1, c1 = 16, 2
    k1, k2, key = jax.random.split(key, 3)
    yhat1 = jax.random.normal(k1, (b1, c1), dtype=jnp.float32)
    y1 = jax.random.normal(k2, (b1, c1), dtype=jnp.float32)
    w1 = jnp.full((c1,), 1.0 / c1, dtype=jnp.float32)
    out1 = jax.block_until_ready(mcrmse_loss(yhat1, y1, w1))
    ref1 = mcrmse_ref(yhat1, y1, w1)
    assert jnp.allclose(out1, ref1, rtol=1e-5, atol=1e-6), (out1, ref1)

    # Case 2: odd batch, C that does not divide 128 (padding + masking path).
    b2, c2 = 37, 3
    k3, k4, key = jax.random.split(key, 3)
    yhat2 = jax.random.normal(k3, (b2, c2), dtype=jnp.float32)
    y2 = jax.random.normal(k4, (b2, c2), dtype=jnp.float32)
    w2 = jnp.full((c2,), 1.0 / c2, dtype=jnp.float32)
    out2 = jax.block_until_ready(mcrmse_loss(yhat2, y2, w2))
    ref2 = mcrmse_ref(yhat2, y2, w2)
    assert jnp.allclose(out2, ref2, rtol=1e-5, atol=1e-6), (out2, ref2)

    # Case 3: b*c is a multiple of LW -> no wrapper pad, unmasked steady-state path.
    b3, c3 = 512, 2
    k5, k6, key = jax.random.split(key, 3)
    yhat3 = jax.random.normal(k5, (b3, c3), dtype=jnp.float32)
    y3 = jax.random.normal(k6, (b3, c3), dtype=jnp.float32)
    w3 = jnp.full((c3,), 1.0 / c3, dtype=jnp.float32)
    out3 = jax.block_until_ready(mcrmse_loss(yhat3, y3, w3))
    ref3 = mcrmse_ref(yhat3, y3, w3)
    assert jnp.allclose(out3, ref3, rtol=1e-5, atol=1e-6), (out3, ref3)

    print("KERNEL_OK")
</pallas_src>

<mosaic_0001>
module attributes {stable_mosaic.version = 11 : i64} {
  func.func @kernel(%arg0: i32, %arg1: i32, %arg2: memref<8x128xf32, #tpu.memory_space<vmem>>, %arg3: memref<8x128xf32, #tpu.memory_space<vmem>>, %arg4: memref<1x128xf32, #tpu.memory_space<vmem>>, %arg5: memref<8x128xf32, #tpu.memory_space<vmem>>, %arg6: memref<8x128xf32, #tpu.memory_space<vmem>>) attributes {dimension_semantics = [#tpu.dimension_semantics<parallel>, #tpu.dimension_semantics<arbitrary>], iteration_bounds = array<i64: 2, 1>, scalar_prefetch = 0 : i64, scratch_operands = 1 : i64, tpu.core_type = #tpu.core_type<tc>, window_params = [{transform_indices = @transform_0, window_bounds = array<i64: 8, 128>}, {transform_indices = @transform_1, window_bounds = array<i64: 8, 128>}, {pipeline_mode = #tpu.pipeline_mode<synchronous>, transform_indices = @transform_2, window_bounds = array<i64: 1, 128>}, {transform_indices = @transform_3, window_bounds = array<i64: 8, 128>}]} {
    %c0_i32 = arith.constant 0 : i32
    %0 = arith.cmpi eq, %arg1, %c0_i32 : i32
    %1 = arith.extui %0 : i1 to i32
    %c0_i32_0 = arith.constant 0 : i32
    %2 = arith.cmpi ne, %1, %c0_i32_0 : i32
    scf.if %2 {
      %cst_10 = arith.constant 0.000000e+00 : f32
      %27 = vector.broadcast %cst_10 : f32 to vector<8x128xf32>
      %c0_11 = arith.constant 0 : index
      %c0_12 = arith.constant 0 : index
      %28 = vector.load %arg6[%c0_11, %c0_12] : memref<8x128xf32, #tpu.memory_space<vmem>>, vector<8x128xf32>
      tpu.vector_store %arg6[%c0_11, %c0_12], %27 {strides = array<i32>} : memref<8x128xf32, #tpu.memory_space<vmem>>, vector<8x128xf32>,
    } else {
    }
    %c0 = arith.constant 0 : index
    %c0_1 = arith.constant 0 : index
    %3 = vector.load %arg2[%c0, %c0_1] : memref<8x128xf32, #tpu.memory_space<vmem>>, vector<8x128xf32>
    %c0_2 = arith.constant 0 : index
    %c0_3 = arith.constant 0 : index
    %4 = vector.load %arg3[%c0_2, %c0_3] : memref<8x128xf32, #tpu.memory_space<vmem>>, vector<8x128xf32>
    %5 = arith.subf %3, %4 : vector<8x128xf32>
    %6 = arith.mulf %5, %5 : vector<8x128xf32>
    %cst = arith.constant 9.99999971E-10 : f32
    %7 = vector.broadcast %cst : f32 to vector<8x128xf32>
    %8 = arith.addf %6, %7 : vector<8x128xf32>
    %9 = math.sqrt %8 : vector<8x128xf32>
    %c1_i32 = arith.constant 1 : i32
    %10 = arith.muli %arg0, %c1_i32 : i32
    %11 = arith.addi %10, %arg1 : i32
    %c1_i32_4 = arith.constant 1 : i32
    %12 = arith.cmpi slt, %11, %c1_i32_4 : i32
    %c8_i32 = arith.constant 8 : i32
    %13 = arith.muli %11, %c8_i32 : i32
    %c8_i32_5 = arith.constant 8 : i32
    %14 = arith.addi %13, %c8_i32_5 : i32
    %c128_i32 = arith.constant 128 : i32
    %15 = arith.muli %14, %c128_i32 : i32
    %c32_i32 = arith.constant 32 : i32
    %16 = arith.cmpi sle, %15, %c32_i32 : i32
    %17 = arith.andi %12, %16 : i1
    %18 = arith.extui %17 : i1 to i32
    %c0_i32_6 = arith.constant 0 : i32
    %19 = arith.cmpi ne, %18, %c0_i32_6 : i32
    scf.if %19 {
      %c0_10 = arith.constant 0 : index
      %c0_11 = arith.constant 0 : index
      %27 = vector.load %arg6[%c0_10, %c0_11] : memref<8x128xf32, #tpu.memory_space<vmem>>, vector<8x128xf32>
      %28 = vector.shape_cast %9 : vector<8x128xf32> to vector<1x8x128xf32>
      %cst_12 = arith.constant dense<0.000000e+00> : vector<8x128xf32>
      %29 = vector.multi_reduction <add>, %28, %cst_12 [0] : vector<1x8x128xf32> to vector<8x128xf32>
      %30 = arith.addf %27, %29 : vector<8x128xf32>
      %c0_13 = arith.constant 0 : index
      %c0_14 = arith.constant 0 : index
      %31 = vector.load %arg6[%c0_13, %c0_14] : memref<8x128xf32, #tpu.memory_space<vmem>>, vector<8x128xf32>
      tpu.vector_store %arg6[%c0_13, %c0_14], %30 {strides = array<i32>} : memref<8x128xf32, #tpu.memory_space<vmem>>, vector<8x128xf32>,
    } else {
    }
    %true = arith.constant true
    %20 = arith.xori %16, %true : i1
    %21 = arith.andi %12, %20 : i1
    %22 = arith.extui %21 : i1 to i32
    %c0_i32_7 = arith.constant 0 : i32
    %23 = arith.cmpi ne, %22, %c0_i32_7 : i32
    scf.if %23 {
      %27 = tpu.iota {dimensions = array<i32: 0>} : vector<8x128xi32>
      %28 = tpu.iota {dimensions = array<i32: 1>} : vector<8x128xi32>
      %29 = vector.broadcast %13 : i32 to vector<8x128xi32>
      %30 = arith.addi %29, %27 : vector<8x128xi32>
      %c128_i32_10 = arith.constant 128 : i32
      %31 = vector.broadcast %c128_i32_10 : i32 to vector<8x128xi32>
      %32 = arith.muli %30, %31 : vector<8x128xi32>
      %33 = arith.addi %32, %28 : vector<8x128xi32>
      %c32_i32_11 = arith.constant 32 : i32
      %34 = vector.broadcast %c32_i32_11 : i32 to vector<8x128xi32>
      %35 = arith.cmpi slt, %33, %34 : vector<8x128xi32>
      %cst_12 = arith.constant 0.000000e+00 : f32
      %36 = vector.broadcast %cst_12 : f32 to vector<8x128xf32>
      %37 = arith.select %35, %9, %36 : vector<8x128xi1>, vector<8x128xf32>
      %c0_13 = arith.constant 0 : index
      %c0_14 = arith.constant 0 : index
      %38 = vector.load %arg6[%c0_13, %c0_14] : memref<8x128xf32, #tpu.memory_space<vmem>>, vector<8x128xf32>
      %39 = vector.shape_cast %37 : vector<8x128xf32> to vector<1x8x128xf32>
      %cst_15 = arith.constant dense<0.000000e+00> : vector<8x128xf32>
      %40 = vector.multi_reduction <add>, %39, %cst_15 [0] : vector<1x8x128xf32> to vector<8x128xf32>
      %41 = arith.addf %38, %40 : vector<8x128xf32>
      %c0_16 = arith.constant 0 : index
      %c0_17 = arith.constant 0 : index
      %42 = vector.load %arg6[%c0_16, %c0_17] : memref<8x128xf32, #tpu.memory_space<vmem>>, vector<8x128xf32>
      tpu.vector_store %arg6[%c0_16, %c0_17], %41 {strides = array<i32>} : memref<8x128xf32, #tpu.memory_space<vmem>>, vector<8x128xf32>,
    } else {
    }
    %c0_i32_8 = arith.constant 0 : i32
    %24 = arith.cmpi eq, %arg1, %c0_i32_8 : i32
    %25 = arith.extui %24 : i1 to i32
    %c0_i32_9 = arith.constant 0 : i32
    %26 = arith.cmpi ne, %25, %c0_i32_9 : i32
    scf.if %26 {
      %c0_10 = arith.constant 0 : index
      %c0_11 = arith.constant 0 : index
      %27 = vector.load %arg6[%c0_10, %c0_11] : memref<8x128xf32, #tpu.memory_space<vmem>>, vector<8x128xf32>
      %c0_12 = arith.constant 0 : index
      %c0_13 = arith.constant 0 : index
      %28 = vector.load %arg4[%c0_12, %c0_13] : memref<1x128xf32, #tpu.memory_space<vmem>>, vector<1x128xf32>
      %29 = vector.broadcast %28 : vector<1x128xf32> to vector<8x128xf32>
      %30 = arith.mulf %27, %29 : vector<8x128xf32>
      %cst_14 = arith.constant dense<0.000000e+00> : vector<128xf32>
      %31 = vector.multi_reduction <add>, %30, %cst_14 [0] : vector<8x128xf32> to vector<128xf32>
      %32 = vector.shape_cast %31 : vector<128xf32> to vector<1x128xf32>
      %cst_15 = arith.constant dense<0.000000e+00> : vector<1xf32>
      %33 = vector.multi_reduction <add>, %32, %cst_15 [1] : vector<1x128xf32> to vector<1xf32>
      %34 = vector.shape_cast %33 : vector<1xf32> to vector<1x1xf32>
      %cst_16 = arith.constant 6.250000e-02 : f32
      %35 = vector.broadcast %cst_16 : f32 to vector<1x1xf32>
      %36 = arith.mulf %34, %35 : vector<1x1xf32>
      %37 = vector.shape_cast %36 : vector<1x1xf32> to vector<1x1xf32>
      %38 = vector.broadcast %37 : vector<1x1xf32> to vector<8x128xf32>
      %c0_17 = arith.constant 0 : index
      %c0_18 = arith.constant 0 : index
      %39 = vector.load %arg5[%c0_17, %c0_18] : memref<8x128xf32, #tpu.memory_space<vmem>>, vector<8x128xf32>
      tpu.vector_store %arg5[%c0_17, %c0_18], %38 {strides = array<i32>} : memref<8x128xf32, #tpu.memory_space<vmem>>, vector<8x128xf32>,
    } else {
    }
    return
  }
  func.func @transform_0(%arg0: i32, %arg1: i32) -> (i32, i32) {
    %c1_i32 = arith.constant 1 : i32
    %0 = arith.muli %arg0, %c1_i32 : i32
    %1 = arith.addi %0, %arg1 : i32
    %c0_i32 = arith.constant 0 : i32
    %2 = arith.minsi %1, %c0_i32 : i32
    %c0_i32_0 = arith.constant 0 : i32
    %c0_i32_1 = arith.constant 0 : i32
    return %2, %c0_i32_0 : i32, i32
  }
  func.func @transform_1(%arg0: i32, %arg1: i32) -> (i32, i32) {
    %c1_i32 = arith.constant 1 : i32
    %0 = arith.muli %arg0, %c1_i32 : i32
    %1 = arith.addi %0, %arg1 : i32
    %c0_i32 = arith.constant 0 : i32
    %2 = arith.minsi %1, %c0_i32 : i32
    %c0_i32_0 = arith.constant 0 : i32
    %c0_i32_1 = arith.constant 0 : i32
    return %2, %c0_i32_0 : i32, i32
  }
  func.func @transform_2(%arg0: i32, %arg1: i32) -> (i32, i32) {
    %c0_i32 = arith.constant 0 : i32
    %c0_i32_0 = arith.constant 0 : i32
    %c0_i32_1 = arith.constant 0 : i32
    return %c0_i32, %c0_i32_0 : i32, i32
  }
  func.func @transform_3(%arg0: i32, %arg1: i32) -> (i32, i32) {
    %c0_i32 = arith.constant 0 : i32
    %c0_i32_0 = arith.constant 0 : i32
    return %arg0, %c0_i32 : i32, i32
  }
}

</mosaic_0001>

<llo_original>
// kernel: tpu_custom_call.1
$region0: #{tpu_custom_call.1}
  #allocation0 [shape = 'u32[]', space=smem, size = 0x4, offset = 0x4, fixed_abs, tag = 'smem constant byte address 0x4 - core index']
  #allocation1 [shape = 'u32[144,128]{1,0:T(1,128)}', space=vmem, size = 0x12000, scoped, tag = 'internal scratch']
  #allocation2 [shape = 'f32[8,128]{1,0:T(8,128)}', space=vmem, size = 0x1000, scoped, tag = 'scratch operand']
  %s0 = inlined_call_operand.hbm [shape: f32[8,128], index: 0, kind: input, shape index: {}]
  %s1 = inlined_call_operand.hbm [shape: f32[8,128], index: 1, kind: input, shape index: {}]
  %s2 = inlined_call_operand.vmem [shape: f32[1,128], index: 2, kind: input, shape index: {}]
  %s3 = inlined_call_operand.hbm [shape: f32[16,128], index: 3, kind: output, shape index: {}]
  %s4 = sld [smem:[#allocation0]]
  $region69: #{tpu_custom_call.1} parent=0
    _
  %s6 = ssub.s32 1, %s4
  %s7 = scalar_select 0, %s6, %s4
  $region1: #{tpu_custom_call.1} parent=0
    #allocation3 [shape = 'u8[8192]{0}', space=vmem, size = 0x2000, scoped, tag = 'input window, operand 0']
    #allocation4 [shape = 's32[2]{0}', space=sflag, size = 0x8, scoped, tag = 'scoped memory for tpu_custom_call.1']
    #allocation5 [shape = 's32[2]{0}', space=sflag, size = 0x8, scoped, tag = 'scoped memory for tpu_custom_call.1']
    #allocation6 [shape = 'u8[8192]{0}', space=vmem, size = 0x2000, scoped, tag = 'input window, operand 1']
    #allocation7 [shape = 's32[2]{0}', space=sflag, size = 0x8, scoped, tag = 'scoped memory for tpu_custom_call.1']
    #allocation8 [shape = 'u8[8192]{0}', space=vmem, size = 0x2000, scoped, tag = 'output window, operand 0']
    %8 = vsyncpa [#allocation4], 0
    %s9 = scalar_lea.sflag [#allocation4], 1
    %10 = vsyncpa %s9, 0
    %11 = vsyncpa [#allocation7], 0
    %s12 = scalar_lea.sflag [#allocation7], 1
    %13 = vsyncpa %s12, 0
    %14 = vsyncpa [#allocation5], 0
    %s15 = scalar_lea.sflag [#allocation5], 1
    %16 = vsyncpa %s15, 0
    loop: start=0, step=1, limit=4
    $region2: #{tpu_custom_call.1} parent=1 // loop_pre_header
      _
    $region3: #{tpu_custom_call.1} parent=1 // loop_header
      %s18 = sphi 0, %s22
      %p19 = scmp.ge.s32.totalorder %s18, 4
      %s25 = sphi 0, %s37
      %s26 = sphi 0, %s33
      %s27 = sphi 0, %s25
      %s28 = sphi 0, %s26
      %s29 = sphi 0, %s27
      %s30 = sphi 0, %s28
      %s46 = sphi 0, %s48
      %s49 = sphi 0, %s46
      %s50 = sphi 0, %s49
      %s66 = sphi 0, %s50
      %s78 = sphi 0, %s80
      %s81 = sphi 0, %s78
      %s82 = sphi 0, %s81
      %s98 = sphi 0, %s82
      %s102 = sphi 0, %s102
      %s104 = sphi 0, %s102
      %s105 = sphi 0, %s104
      %s119 = sphi 0, %s105
      %s125 = sphi 0, %s127
      %s128 = sphi 0, %s125
      %s129 = sphi 0, %s128
      %s145 = sphi 0, %s129
    $region4: #{tpu_custom_call.1} parent=1 // loop_header_branch
      %21 = sbr.rel (%p19) target = $region8
    $region5: #{tpu_custom_call.1} parent=1 // loop_body
      %s23 = ssub.s32 %s18, 1
      %s24 = ssub.s32 %s18, 2
      %s31 = sadd.s32 1, %s26
      %p32 = scmp.ge.s32.totalorder %s31, 1
      %s33 = scalar_select %p32, 0, %s31
      %s34 = sadd.s32 1, %s25
      %s35 = scalar_select %p32, %s34, %s25
      %p36 = scmp.ge.s32.totalorder %s35, 2
      %s37 = scalar_select %p36, 0, %s35
      %s38 = sadd.s32 %s25, %s26
      %p39 = scmp.lt.s32.totalorder %s38, 0
      %s40 = scalar_select %p39, %s38, 0
      %s41 = sadd.s32 %s37, %s33
      %p42 = scmp.lt.s32.totalorder %s41, 0
      %s43 = scalar_select %p42, %s41, 0
      %s44 = ssub.s32 %s40, %s43
      %p45 = scmp.eq.s32.totalorder %s44, 0
      %s47 = sadd.s32 %s46, 1
      %s48 = scalar_select %p45, %s46, %s47
      %p51 = pneg %p45
      %p52 = scmp.eq.s32.totalorder %s18, 1
      %p53 = por %p51, %p52
      %p54 = scmp.ne.s32.totalorder %s46, %s49
      %p55 = scmp.eq.s32.totalorder %s18, 0
      %p56 = por %p54, %p55
      %p57 = scmp.ne.s32.totalorder %s46, %s49
      %p58 = scmp.eq.s32.totalorder %s23, 1
      %p59 = por %p57, %p58
      %p60 = scmp.ne.s32.totalorder %s49, %s50
      %p61 = scmp.eq.s32.totalorder %s23, 0
      %p62 = por %p60, %p61
      %p63 = scmp.ne.s32.totalorder %s49, %s50
      %p64 = scmp.eq.s32.totalorder %s24, 1
      %p65 = por %p63, %p64
      %p67 = scmp.ne.s32.totalorder %s50, %s66
      %p68 = scmp.eq.s32.totalorder %s24, 0
      %p69 = por %p67, %p68
      %s70 = sadd.s32 %s25, %s26
      %p71 = scmp.lt.s32.totalorder %s70, 0
      %s72 = scalar_select %p71, %s70, 0
      %s73 = sadd.s32 %s37, %s33
      %p74 = scmp.lt.s32.totalorder %s73, 0
      %s75 = scalar_select %p74, %s73, 0
      %s76 = ssub.s32 %s72, %s75
      %p77 = scmp.eq.s32.totalorder %s76, 0
      %s79 = sadd.s32 %s78, 1
      %s80 = scalar_select %p77, %s78, %s79
      %p83 = pneg %p77
      %p84 = scmp.eq.s32.totalorder %s18, 1
      %p85 = por %p83, %p84
      %p86 = scmp.ne.s32.totalorder %s78, %s81
      %p87 = scmp.eq.s32.totalorder %s18, 0
      %p88 = por %p86, %p87
      %p89 = scmp.ne.s32.totalorder %s78, %s81
      %p90 = scmp.eq.s32.totalorder %s23, 1
      %p91 = por %p89, %p90
      %p92 = scmp.ne.s32.totalorder %s81, %s82
      %p93 = scmp.eq.s32.totalorder %s23, 0
      %p94 = por %p92, %p93
      %p95 = scmp.ne.s32.totalorder %s81, %s82
      %p96 = scmp.eq.s32.totalorder %s24, 1
      %p97 = por %p95, %p96
      %p99 = scmp.ne.s32.totalorder %s82, %s98
      %p100 = scmp.eq.s32.totalorder %s24, 0
      %p101 = por %p99, %p100
      %s103 = sadd.s32 %s102, 1
      %p106 = scmp.eq.s32.totalorder %s18, 1
      %p107 = scmp.ne.s32.totalorder %s102, %s104
      %p108 = scmp.eq.s32.totalorder %s18, 0
      %p109 = por %p107, %p108
      %p110 = scmp.ne.s32.totalorder %s102, %s104
      %p111 = scmp.eq.s32.totalorder %s23, 1
      %p112 = por %p110, %p111
      %p113 = scmp.ne.s32.totalorder %s104, %s105
      %p114 = scmp.eq.s32.totalorder %s23, 0
      %p115 = por %p113, %p114
      %p116 = scmp.ne.s32.totalorder %s104, %s105
      %p117 = scmp.eq.s32.totalorder %s24, 1
      %p118 = por %p116, %p117
      %p120 = scmp.ne.s32.totalorder %s105, %s119
      %p121 = scmp.eq.s32.totalorder %s24, 0
      %p122 = por %p120, %p121
      %s123 = ssub.s32 %s25, %s37
      %p124 = scmp.eq.s32.totalorder %s123, 0
      %s126 = sadd.s32 %s125, 1
      %s127 = scalar_select %p124, %s125, %s126
      %p130 = pneg %p124
      %p131 = scmp.eq.s32.totalorder %s18, 1
      %p132 = por %p130, %p131
      %p133 = scmp.ne.s32.totalorder %s125, %s128
      %p134 = scmp.eq.s32.totalorder %s18, 0
      %p135 = por %p133, %p134
      %p136 = scmp.ne.s32.totalorder %s125, %s128
      %p137 = scmp.eq.s32.totalorder %s23, 1
      %p138 = por %p136, %p137
      %p139 = scmp.ne.s32.totalorder %s128, %s129
      %p140 = scmp.eq.s32.totalorder %s23, 0
      %p141 = por %p139, %p140
      %p142 = scmp.ne.s32.totalorder %s128, %s129
      %p143 = scmp.eq.s32.totalorder %s24, 1
      %p144 = por %p142, %p143
      %p146 = scmp.ne.s32.totalorder %s129, %s145
      %p147 = scmp.eq.s32.totalorder %s24, 0
      %p148 = por %p146, %p147
      %p149 = scmp.le.s32.totalorder 1, %s18
      %p150 = scmp.lt.s32.totalorder %s18, 3
      %p151 = pnand %p149, %p150
      %p152 = pneg %p151
      // Predicated region
      $region9: #{tpu_custom_call.1} parent=5 // pred_check
        _
      $region10: #{tpu_custom_call.1} parent=5 // pred_check_branch
        %154 = sbr.rel (%p151) target = $region12
      $region11: #{tpu_custom_call.1} parent=5 // pred_region
        %s155 = ssub.s32 %s18, 1
        // Predicated region
        $region13: #{tpu_custom_call.1} parent=11 // pred_check
          %p156 = pneg %p115
        $region14: #{tpu_custom_call.1} parent=11 // pred_check_branch
          %158 = sbr.rel (%p156) target = $region16
        $region15: #{tpu_custom_call.1} parent=11 // pred_region
          _
        $region16: #{tpu_custom_call.1} parent=11 // pred_fallthru
          _
      $region12: #{tpu_custom_call.1} parent=5 // pred_fallthru
        _
      %p159 = scmp.lt.s32.totalorder %s18, 2
      // Predicated region
      $region17: #{tpu_custom_call.1} parent=5 // pred_check
        %p160 = pneg %p159
      $region18: #{tpu_custom_call.1} parent=5 // pred_check_branch
        %162 = sbr.rel (%p160) target = $region20
      $region19: #{tpu_custom_call.1} parent=5 // pred_region
        // Predicated region
        $region21: #{tpu_custom_call.1} parent=19 // pred_check
          %p163 = pneg %p56
        $region22: #{tpu_custom_call.1} parent=19 // pred_check_branch
          %165 = sbr.rel (%p163) target = $region24
        $region23: #{tpu_custom_call.1} parent=19 // pred_region
          %s166 = sand.u32 %s46, 1
          %s167 = scalar_lea.sflag [#allocation4], %s166
          %s168 = sand.u32 %s46, 1
          %s169 = smul.addr %s168, 8
          %s170 = scalar_lea.vmem [#allocation3], %s169
          %s171 = sadd.s32 %s25, %s26
          %p172 = scmp.lt.s32.totalorder %s171, 0
          %s173 = scalar_select %p172, %s171, 0
          %s175 = ssub.s32 128, 128
          %176 = vsyncadd %s167, %s175
          %s177 = smul.addr %s173, 128
          %s178 = scalar_lea.hbm %s0, %s177
          %s180 = sshll.u32 %s170, 4
          %s181 = int_to_ptr.vmem [resolvable:$true] %s180
          %183 = dma.hbm_to_vmem [thread:$0]  %s178, 128, %s181, %s167
        $region24: #{tpu_custom_call.1} parent=19 // pred_fallthru
          _
        // Predicated region
        $region25: #{tpu_custom_call.1} parent=19 // pred_check
          %p184 = pneg %p88
        $region26: #{tpu_custom_call.1} parent=19 // pred_check_branch
          %186 = sbr.rel (%p184) target = $region28
        $region27: #{tpu_custom_call.1} parent=19 // pred_region
          %s187 = sand.u32 %s78, 1
          %s188 = scalar_lea.sflag [#allocation7], %s187
          %s189 = sand.u32 %s78, 1
          %s190 = smul.addr %s189, 8
          %s191 = scalar_lea.vmem [#allocation6], %s190
          %s192 = sadd.s32 %s25, %s26
          %p193 = scmp.lt.s32.totalorder %s192, 0
          %s194 = scalar_select %p193, %s192, 0
          %s196 = ssub.s32 128, 128
          %197 = vsyncadd %s188, %s196
          %s198 = smul.addr %s194, 128
          %s199 = scalar_lea.hbm %s1, %s198
          %s201 = sshll.u32 %s191, 4
          %s202 = int_to_ptr.vmem [resolvable:$true] %s201
          %204 = dma.hbm_to_vmem [thread:$0]  %s199, 128, %s202, %s188
        $region28: #{tpu_custom_call.1} parent=19 // pred_fallthru
          _
      $region20: #{tpu_custom_call.1} parent=5 // pred_fallthru
        _
      %p205 = scmp.le.s32.totalorder 1, %s18
      %p206 = scmp.lt.s32.totalorder %s18, 3
      %p207 = pnand %p205, %p206
      %p208 = pneg %p207
      // Predicated region
      $region29: #{tpu_custom_call.1} parent=5 // pred_check
        _
      $region30: #{tpu_custom_call.1} parent=5 // pred_check_branch
        %210 = sbr.rel (%p207) target = $region32
      $region31: #{tpu_custom_call.1} parent=5 // pred_region
        %s211 = ssub.s32 %s18, 1
        %s212 = sand.u32 %s49, 1
        %s213 = scalar_lea.sflag [#allocation4], %s212
        %s214 = sand.u32 %s49, 1
        %s215 = smul.addr %s214, 8
        %s216 = scalar_lea.vmem [#allocation3], %s215
        // Predicated region
        $region33: #{tpu_custom_call.1} parent=31 // pred_check
          %p217 = pneg %p62
        $region34: #{tpu_custom_call.1} parent=31 // pred_check_branch
          %219 = sbr.rel (%p217) target = $region36
        $region35: #{tpu_custom_call.1} parent=31 // pred_region
          %220 = dma.done %s213, 128
        $region36: #{tpu_custom_call.1} parent=31 // pred_fallthru
          _
        %s221 = sand.u32 %s81, 1
        %s222 = scalar_lea.sflag [#allocation7], %s221
        %s223 = sand.u32 %s81, 1
        %s224 = smul.addr %s223, 8
        %s225 = scalar_lea.vmem [#allocation6], %s224
        // Predicated region
        $region37: #{tpu_custom_call.1} parent=31 // pred_check
          %p226 = pneg %p94
        $region38: #{tpu_custom_call.1} parent=31 // pred_check_branch
          %228 = sbr.rel (%p226) target = $region40
        $region39: #{tpu_custom_call.1} parent=31 // pred_region
          %229 = dma.done %s222, 128
        $region40: #{tpu_custom_call.1} parent=31 // pred_fallthru
          _
        %s230 = sand.u32 %s49, 1
        %s231 = scalar_lea.sflag [#allocation4], %s230
        %s232 = sand.u32 %s49, 1
        %s233 = smul.addr %s232, 8
        %s234 = scalar_lea.vmem [#allocation3], %s233
        %p235 = pneg %p62
        %p236 = pneg %p59
        %s237 = sand.u32 %s81, 1
        %s238 = scalar_lea.sflag [#allocation7], %s237
        %s239 = sand.u32 %s81, 1
        %s240 = smul.addr %s239, 8
        %s241 = scalar_lea.vmem [#allocation6], %s240
        %p242 = pneg %p94
        %p243 = pneg %p91
        %p244 = pneg %p115
        %p245 = pneg %p112
        %p246 = pneg %p141
        %p247 = pneg %p138
        %s248 = sand.u32 %s128, 1
        %s249 = scalar_lea.sflag [#allocation5], %s248
        %s250 = sand.u32 %s128, 1
        %s251 = smul.addr %s250, 8
        %s252 = scalar_lea.vmem [#allocation8], %s251
        %s253 = sadd.s32 %s27, %s28
        %p254 = scmp.lt.s32.totalorder %s253, 0
        %s255 = scalar_select %p254, %s253, 0
        %s256 = sadd.s32 %s27, %s28
        %p257 = scmp.lt.s32.totalorder %s256, 0
        %s258 = scalar_select %p257, %s256, 0
        %p259 = scmp.eq.s32.totalorder %s28, 0
        // Predicated region
        $region41: #{tpu_custom_call.1} parent=31 // pred_check
          %p260 = pneg %p259
        $region42: #{tpu_custom_call.1} parent=31 // pred_check_branch
          %262 = sbr.rel (%p260) target = $region44
        $region43: #{tpu_custom_call.1} parent=31 // pred_region
          %263 = vst [vmem:[#allocation2] sm:$0xff] 0.0
        $region44: #{tpu_custom_call.1} parent=31 // pred_fallthru
          _
        %v264 = vld [vmem:[%s216] sm:$0xff]
        %v265 = vld [vmem:[%s225] sm:$0xff]
        %v266 = vsub.f32 %v264, %v265
        %v267 = vmul.f32 %v266, %v266
        %v268 = vadd.f32 %v267, 1e-09
        %v269 = vrsqrt.pop %v268
        %v270 = vmul.f32 %v268, %v269
        %vm271 = vcmp.eq.f32.partialorder %v268, inf
        %v272 = vsel %vm271, %v268, %v270
        %vm273 = vcmp.eq.f32.partialorder %v268, 0.0
        %v274 = vand.u32 %v268, 2147483648
        %v275 = vsel %vm273, %v274, %v272
        %s276 = sadd.s32 %s27, %s28
        %p277 = scmp.lt.s32.totalorder %s276, 1
        %s278 = smul.u32 %s276, 8
        %s279 = sadd.s32 %s278, 8
        %s280 = smul.u32 %s279, 128
        %p281 = scmp.le.s32.totalorder %s280, 32
        %p282 = pnand %p277, %p281
        %p283 = pneg %p282
        // Predicated region
        $region45: #{tpu_custom_call.1} parent=31 // pred_check
          _
        $region46: #{tpu_custom_call.1} parent=31 // pred_check_branch
          %285 = sbr.rel (%p282) target = $region48
        $region47: #{tpu_custom_call.1} parent=31 // pred_region
          %v286 = vld [vmem:[#allocation2] sm:$0xff]
          %v287 = vadd.f32 %v275, 0.0
          %v288 = vadd.f32 %v286, %v287
          %289 = vst [vmem:[#allocation2] sm:$0xff] %v288
        $region48: #{tpu_custom_call.1} parent=31 // pred_fallthru
          _
        %p290 = scmp.gt.s32.totalorder %s280, 32
        %p291 = pnand %p277, %p290
        %p292 = pneg %p291
        // Predicated region
        $region49: #{tpu_custom_call.1} parent=31 // pred_check
          _
        $region50: #{tpu_custom_call.1} parent=31 // pred_check_branch
          %294 = sbr.rel (%p291) target = $region52
        $region51: #{tpu_custom_call.1} parent=31 // pred_region
          %v295 = vlaneseq
          %v296 = vshrl.u32 %v295, 7
          %v297 = vlaneseq
          %v298 = vand.u32 %v297, 127
          %v299 = vstv %s278
          %v300 = vadd.s32 %v299, %v296
          %v301 = vmul.u32 %v300, 128
          %v302 = vadd.s32 %v301, %v298
          %vm303 = vcmp.lt.s32.totalorder %v302, 32
          %v304 = vsel %vm303, %v275, 0.0
          %v305 = vld [vmem:[#allocation2] sm:$0xff]
          %v306 = vadd.f32 %v304, 0.0
          %v307 = vadd.f32 %v305, %v306
          %308 = vst [vmem:[#allocation2] sm:$0xff] %v307
        $region52: #{tpu_custom_call.1} parent=31 // pred_fallthru
          _
        // Predicated region
        $region53: #{tpu_custom_call.1} parent=31 // pred_check
          %p309 = pneg %p259
        $region54: #{tpu_custom_call.1} parent=31 // pred_check_branch
          %311 = sbr.rel (%p309) target = $region56
        $region55: #{tpu_custom_call.1} parent=31 // pred_region
          %v312 = vld [vmem:[#allocation2] sm:$0xff]
          %v313 = vld [vmem:[%s2] sm:$0x1]
          %v315 = vlaneseq
          %v316 = vshrl.u32 %v315, 7
          %v317 = vsub.s32 0, %v316
          %v318 = vrot.slane %v313, %v317
          %v320 = vmul.f32 %v312, %v318
          %v321 = vrot.slane %v320, 4
          %v322 = vadd.f32 %v320, %v321
          %v323 = vrot.slane %v322, 2
          %v324 = vadd.f32 %v322, %v323
          %v325 = vrot.slane %v324, 1
          %v326 = vadd.f32 %v324, %v325
          %327 = vadd.xlane.f32.xlu0 %v326
          %v328 = vpop.xlane.xlu0 %327
          %v329 = vmul.f32 %v328, 0.0625
          %330 = vst [vmem:[%s252] sm:$0xff] %v329
        $region56: #{tpu_custom_call.1} parent=31 // pred_fallthru
          _
        %s331 = sand.u32 %s128, 1
        %s332 = scalar_lea.sflag [#allocation5], %s331
        %s333 = sand.u32 %s128, 1
        %s334 = smul.addr %s333, 8
        %s335 = scalar_lea.vmem [#allocation8], %s334
        // Predicated region
        $region57: #{tpu_custom_call.1} parent=31 // pred_check
          %p336 = pneg %p138
        $region58: #{tpu_custom_call.1} parent=31 // pred_check_branch
          %338 = sbr.rel (%p336) target = $region60
        $region59: #{tpu_custom_call.1} parent=31 // pred_region
          %s340 = ssub.s32 128, 128
          %341 = vsyncadd %s332, %s340
          %s342 = smul.addr %s27, 128
          %s343 = scalar_lea.hbm %s3, %s342
          %s345 = sshll.u32 %s335, 4
          %s346 = int_to_ptr.vmem [resolvable:$true] %s345
          %348 = dma.vmem_to_hbm [thread:$0]  %s346, 128, %s343, %s332
        $region60: #{tpu_custom_call.1} parent=31 // pred_fallthru
          _
      $region32: #{tpu_custom_call.1} parent=5 // pred_fallthru
        _
      %p349 = scmp.le.s32.totalorder 2, %s18
      // Predicated region
      $region61: #{tpu_custom_call.1} parent=5 // pred_check
        %p350 = pneg %p349
      $region62: #{tpu_custom_call.1} parent=5 // pred_check_branch
        %352 = sbr.rel (%p350) target = $region64
      $region63: #{tpu_custom_call.1} parent=5 // pred_region
        %s353 = ssub.s32 %s18, 2
        // Predicated region
        $region65: #{tpu_custom_call.1} parent=63 // pred_check
          %p354 = pneg %p144
        $region66: #{tpu_custom_call.1} parent=63 // pred_check_branch
          %356 = sbr.rel (%p354) target = $region68
        $region67: #{tpu_custom_call.1} parent=63 // pred_region
          %s357 = sand.u32 %s129, 1
          %s358 = scalar_lea.sflag [#allocation5], %s357
          %s359 = sand.u32 %s129, 1
          %s360 = smul.addr %s359, 8
          %s361 = scalar_lea.vmem [#allocation8], %s360
          %362 = dma.done %s358, 128
        $region68: #{tpu_custom_call.1} parent=63 // pred_fallthru
          _
      $region64: #{tpu_custom_call.1} parent=5 // pred_fallthru
        _
    $region6: #{tpu_custom_call.1} parent=1 // loop_footer
      %s22 = sadd.s32 1, %s18
    $region7: #{tpu_custom_call.1} parent=1 // loop_footer_branch
      %17 = sbr.rel target = $region3
    $region8: #{tpu_custom_call.1} parent=1 // loop_exit
      _
    %363 = vsyncpa [#allocation4], 1
    %s364 = scalar_lea.sflag [#allocation4], 1
    %365 = vsyncpa %s364, 1
    %366 = vsyncpa [#allocation7], 1
    %s367 = scalar_lea.sflag [#allocation7], 1
    %368 = vsyncpa %s367, 1
    %369 = vsyncpa [#allocation5], 1
    %s370 = scalar_lea.sflag [#allocation5], 1
    %371 = vsyncpa %s370, 1

</llo_original>
